<compile_context>
chip_gen: v6e
topology: v6e:2x2x1
jax: 0.10.0
libtpu: 0.0.40
codegen_flags: <defaults>
</compile_context>

<pallas_src>
import functools

import jax
import jax.numpy as jnp
from jax.experimental import pallas as pl
from jax.experimental.pallas import tpu as pltpu


def _round_up(x, m):
    return ((x + m - 1) // m) * m


def _im2col_matmul(x, w_flat, k_taps, width_out):
    """One 'SAME' conv as a single MXU matmul.

    x:       (C, width_out + k_taps - 1)  halo-padded input slab
    w_flat:  (Cout, k_taps * C), row order k*C + c  (matches the concat below)
    returns: (Cout, width_out) f32

    Note: on v7x (MRB in-place accumulation) K per-tap dots accumulated into one f32
    value may beat materializing the K lane-shifted im2col copies; the single big matmul
    is kept here (favored by v5e/v6e's MXU result FIFO) — decide from a bundle dump.
    """
    cols = [x[:, k:k + width_out] for k in range(k_taps)]   # static lane-shifted slices
    col = jnp.concatenate(cols, axis=0)                     # (C*K, width_out), sublane-aligned
    return jnp.dot(w_flat, col, preferred_element_type=jnp.float32)


def transfer_net_kernel(x_ref, w1_ref, b1_ref, w2_ref, b2_ref, m1_ref, fea_ref,
                        *, K, compute_dtype):
    Wh = m1_ref.shape[1]          # conv1 output width (conv2 input, with halo)
    Wv = fea_ref.shape[1]         # conv2 / feamap width (lane-dense gapped slab)

    x = x_ref[...]                                                    # (Cin_p, Wx)

    # Conv1 -> bias -> ReLU, then zero per-sample pad / halo / tail columns so conv2's
    # 'SAME' padding is honored at every sample boundary inside the batched slab.
    raw1 = _im2col_matmul(x, w1_ref[...], K, Wh)                      # (Cm_p, Wh) f32
    h1 = jnp.maximum(raw1 + b1_ref[...], 0.0) * m1_ref[...]
    h1 = h1.astype(compute_dtype)                                     # bf16 opt-in (v6e/v7x)

    # Conv2 -> bias -> ReLU; dense lane-major feamap slab store.
    raw2 = _im2col_matmul(h1, w2_ref[...], K, Wv)                     # (C2, Wv) f32
    h2 = jnp.maximum(raw2 + b2_ref[...], 0.0)
    fea_ref[...] = h2.astype(fea_ref.dtype)


def _tpu_vmem_capacity_bytes(default=64 << 20):
    try:
        info = pltpu.get_tpu_info()
        cap = int(getattr(info, "vmem_capacity_bytes", 0))
        if cap > 0:
            return cap
    except Exception:
        pass
    return default     # conservative (v7x-sized) when the query is unavailable


def _choose_nb(n, lp, bytes_per_col, budget_bytes):
    """Largest divisor of n whose NB*Lp-wide slab fits the VMEM budget, keeping G >= 2."""
    max_cols = max(budget_bytes // max(bytes_per_col, 1), lp)
    nb_cap = max(1, min(n, max_cols // lp))
    if n >= 2:
        nb_cap = max(1, min(nb_cap, n // 2))   # G >= 2: both v7x TensorCores get work
    best = 1
    for nb in range(1, nb_cap + 1):
        if n % nb == 0:
            best = nb
    return best


def transfer_net_forward(x, params, *, nb=None, operand_dtype=jnp.float32):
    """x: (N, Cin, L) f32.  Returns (clfout (N, NC), feamap (N, C2, L)).

    operand_dtype=jnp.bfloat16 halves HBM traffic / doubles MXU throughput for the conv
    matmuls on v6e/v7x (f32 accumulation; loosens exact parity with the f32 reference).
    """
    w1, b1, w2, b2, wc, bc = params
    N, Cin, L = x.shape
    Cm, _, K = w1.shape
    C2 = w2.shape[0]
    NC = wc.shape[0]
    assert K % 2 == 1, "SAME conv assumed (odd kernel size)"

    f32 = jnp.float32
    half = K // 2
    Lp = L + 2 * half                        # per-sample SAME-padded length
    cin_p = _round_up(Cin, 8)                # sublane-aligned channel counts (zero pad)
    cm_p = _round_up(Cm, 8)

    # ---- generation-aware VMEM budget -> NB (samples per grid step) ----
    vmem_cap = _tpu_vmem_capacity_bytes()
    vmem_limit = max(32 << 20, min(int(vmem_cap * 3 // 4), 112 << 20))
    # Rough per-lane-column VMEM bytes of the pipelined kernel (f32, conservative):
    #   x slab (2 buffers) + conv1 im2col slab + h1 + conv2 im2col slab + h2
    #   + feamap output (2 buffers) + mask/slack.
    bytes_per_col = 4 * (2 * cin_p + K * cin_p + cm_p + K * cm_p + C2 + 2 * C2 + 2)
    slab_budget = int(vmem_limit * 0.7)
    NB = nb if nb is not None else _choose_nb(N, Lp, bytes_per_col, slab_budget)
    assert N % NB == 0
    G = N // NB                              # grid length (batch groups); >= 2 when N >= 2
    Wv_raw = NB * Lp                         # gapped slab width (real columns)
    Wv = _round_up(Wv_raw, 128)              # lane-dense feamap store width
    Wh = Wv + 2 * half                       # conv1 output width (halo for conv2)
    Wx = Wv + 4 * half                       # x slab width (halo for conv1 of halo'd h1)

    # ---- wrapper-side layout plumbing (done once, outside the kernel) ----
    xg = jnp.pad(x.astype(f32), ((0, 0), (0, cin_p - Cin), (half, half)))     # (N, cin_p, Lp)
    xg = xg.reshape(G, NB, cin_p, Lp).transpose(0, 2, 1, 3).reshape(G, cin_p, Wv_raw)
    xg = jnp.pad(xg, ((0, 0), (0, 0), (2 * half, (Wv - Wv_raw) + 2 * half)))  # (G, cin_p, Wx)
    xg = xg.astype(operand_dtype)

    # im2col-flattened conv weights; row order = k*C + c (matches the kernel concat order).
    w1p = jnp.pad(w1.astype(f32), ((0, cm_p - Cm), (0, cin_p - Cin), (0, 0)))
    w2p = jnp.pad(w2.astype(f32), ((0, 0), (0, cm_p - Cm), (0, 0)))
    w1f = jnp.transpose(w1p, (0, 2, 1)).reshape(cm_p, K * cin_p).astype(operand_dtype)
    w2f = jnp.transpose(w2p, (0, 2, 1)).reshape(C2, K * cm_p).astype(operand_dtype)
    b1c = jnp.pad(b1.astype(f32), (0, cm_p - Cm)).reshape(cm_p, 1)
    b2c = b2.astype(f32).reshape(C2, 1)

    # Validity of gapped column p in [0, Wv): real data lives at p < NB*Lp with
    # p mod Lp in [half, half+L); h1 column i corresponds to gapped position i - half.
    p_idx = jnp.arange(Wv)
    valid = (p_idx < Wv_raw) & ((p_idx % Lp) >= half) & ((p_idx % Lp) < half + L)
    mask1 = jnp.zeros((1, Wh), f32).at[0, half:half + Wv].set(valid.astype(f32))

    kernel = functools.partial(transfer_net_kernel, K=K, compute_dtype=operand_dtype)

    def _const_spec(shape, buffered):
        index_map = lambda g: (0,) * len(shape)
        if buffered:
            try:
                # Grid-invariant constants are fetched once; no need to double-buffer.
                return pl.BlockSpec(shape, index_map, pipeline_mode=pl.Buffered(1))
            except Exception:
                pass
        return pl.BlockSpec(shape, index_map)

    def _run(buffered):
        return pl.pallas_call(
            kernel,
            out_shape=jax.ShapeDtypeStruct((G, C2, Wv), f32),
            grid_spec=pltpu.PrefetchScalarGridSpec(
                num_scalar_prefetch=0,
                grid=(G,),
                in_specs=[
                    pl.BlockSpec((None, cin_p, Wx), lambda g: (g, 0, 0)),  # x slab
                    _const_spec((cm_p, K * cin_p), buffered),              # w1 (im2col-flat)
                    _const_spec((cm_p, 1), buffered),                      # b1 column
                    _const_spec((C2, K * cm_p), buffered),                 # w2 (im2col-flat)
                    _const_spec((C2, 1), buffered),                        # b2 column
                    _const_spec((1, Wh), buffered),                        # h1 validity mask
                ],
                out_specs=pl.BlockSpec((None, C2, Wv), lambda g: (g, 0, 0)),
            ),
            compiler_params=pltpu.CompilerParams(
                dimension_semantics=("parallel",),        # megacore / dual-TC sharding
                vmem_limit_bytes=vmem_limit,
            ),
        )(xg, w1f, b1c, w2f, b2c, mask1)

    try:
        fea_g = _run(buffered=True)
    except Exception:
        # Fallback for JAX builds that reject pipeline_mode / Buffered(1) on BlockSpec.
        fea_g = _run(buffered=False)

    # ---- un-gap + classifier head (fused by XLA into one pass over feamap) ----
    # A downstream Pallas consumer (e.g. the MMD / domain loss) could take the gapped
    # (G, C2, Wv) slab directly and skip this HBM pass; here the PyTorch (N, C, L) layout
    # must be returned, and the tiny mean-pool + Linear head rides the same read (this
    # replaces the quadratic in-kernel (Wv, NB) pooling matmul).
    fea_gap = fea_g[..., :Wv_raw].reshape(G, C2, NB, Lp)[..., half:half + L]  # (G,C2,NB,L)
    fea = jnp.transpose(fea_gap, (0, 2, 1, 3)).reshape(N, C2, L)

    pooled = jnp.transpose(jnp.mean(fea_gap, axis=-1), (0, 2, 1)).reshape(N, C2)
    clf = pooled @ wc.astype(f32).T + bc.astype(f32)[None, :]
    return clf, fea


def reference_forward(x, params):
    """Pure-JAX reference of the same forward pass (for verification)."""
    w1, b1, w2, b2, wc, bc = params

    def conv(z, w, b):
        out = jax.lax.conv_general_dilated(
            z, w, window_strides=(1,), padding="SAME",
            dimension_numbers=("NCH", "OIH", "NCH"),
            precision=jax.lax.Precision.HIGHEST)
        return out + b[None, :, None]

    h1 = jax.nn.relu(conv(x, w1, b1))
    h2 = jax.nn.relu(conv(h1, w2, b2))
    clf = jnp.dot(h2.mean(axis=2), wc.T, precision=jax.lax.Precision.HIGHEST) + bc
    return clf, h2


if __name__ == "__main__":
    key = jax.random.PRNGKey(0)
    N, Cin, L = 4, 4, 16          # small shapes consistent with a Conv1d backbone
    Cm, C2, K, NC = 8, 16, 3, 4   # hidden channels, kernel size, num classes

    ks = jax.random.split(key, 7)
    w1 = jax.random.normal(ks[0], (Cm, Cin, K), jnp.float32) * 0.2
    b1 = jax.random.normal(ks[1], (Cm,), jnp.float32) * 0.1
    w2 = jax.random.normal(ks[2], (C2, Cm, K), jnp.float32) * 0.2
    b2 = jax.random.normal(ks[3], (C2,), jnp.float32) * 0.1
    wc = jax.random.normal(ks[4], (NC, C2), jnp.float32) * 0.2
    bc = jax.random.normal(ks[5], (NC,), jnp.float32) * 0.1
    x = jax.random.normal(ks[6], (N, Cin, L), jnp.float32)

    params = (w1, b1, w2, b2, wc, bc)
    clf_ref, fea_ref = reference_forward(x, params)

    # f32 path: exact parity with the reference (multi-sample slab + multi-step grid).
    clfout, feamap = transfer_net_forward(x, params)
    jax.block_until_ready((clfout, feamap))
    assert clfout.shape == (N, NC) and feamap.shape == (N, C2, L)
    assert jnp.allclose(clfout, clf_ref, atol=1e-4, rtol=1e-4)
    assert jnp.allclose(feamap, fea_ref, atol=1e-4, rtol=1e-4)

    # bf16-operand path (v6e/v7x HBM/MXU optimization): looser tolerance.
    clf_bf, fea_bf = transfer_net_forward(x, params, operand_dtype=jnp.bfloat16)
    jax.block_until_ready((clf_bf, fea_bf))
    assert jnp.allclose(clf_bf, clf_ref, atol=1e-1, rtol=1e-1)
    assert jnp.allclose(fea_bf, fea_ref, atol=1e-1, rtol=1e-1)

    print("KERNEL_OK")
</pallas_src>

<mosaic_0001>
module attributes {stable_mosaic.version = 11 : i64} {
  func.func @transfer_net_kernel(%arg0: i32, %arg1: memref<1x8x132xf32, #tpu.memory_space<vmem>>, %arg2: memref<8x24xf32, #tpu.memory_space<vmem>>, %arg3: memref<8x1xf32, #tpu.memory_space<vmem>>, %arg4: memref<16x24xf32, #tpu.memory_space<vmem>>, %arg5: memref<16x1xf32, #tpu.memory_space<vmem>>, %arg6: memref<1x130xf32, #tpu.memory_space<vmem>>, %arg7: memref<1x16x128xf32, #tpu.memory_space<vmem>>) attributes {dimension_semantics = [#tpu.dimension_semantics<parallel>], iteration_bounds = array<i64: 2>, scalar_prefetch = 0 : i64, scratch_operands = 0 : i64, tpu.core_type = #tpu.core_type<tc>, window_params = [{transform_indices = @transform_0, window_bounds = array<i64: 1, 8, 132>}, {pipeline_mode = #tpu.pipeline_mode<synchronous>, transform_indices = @transform_1, window_bounds = array<i64: 8, 24>}, {pipeline_mode = #tpu.pipeline_mode<synchronous>, transform_indices = @transform_2, window_bounds = array<i64: 8, 1>}, {pipeline_mode = #tpu.pipeline_mode<synchronous>, transform_indices = @transform_3, window_bounds = array<i64: 16, 24>}, {pipeline_mode = #tpu.pipeline_mode<synchronous>, transform_indices = @transform_4, window_bounds = array<i64: 16, 1>}, {pipeline_mode = #tpu.pipeline_mode<synchronous>, transform_indices = @transform_5, window_bounds = array<i64: 1, 130>}, {transform_indices = @transform_6, window_bounds = array<i64: 1, 16, 128>}]} {
    %c0 = arith.constant 0 : index
    %c0_0 = arith.constant 0 : index
    %c0_1 = arith.constant 0 : index
    %0 = vector.load %arg1[%c0, %c0_0, %c0_1] : memref<1x8x132xf32, #tpu.memory_space<vmem>>, vector<1x8x132xf32>
    %1 = vector.shape_cast %0 : vector<1x8x132xf32> to vector<8x132xf32>
    %c0_2 = arith.constant 0 : index
    %c0_3 = arith.constant 0 : index
    %2 = vector.load %arg2[%c0_2, %c0_3] : memref<8x24xf32, #tpu.memory_space<vmem>>, vector<8x24xf32>
    %3 = vector.extract_strided_slice %1 {offsets = [0, 0], sizes = [8, 130], strides = [1, 1]} : vector<8x132xf32> to vector<8x130xf32>
    %4 = vector.extract_strided_slice %1 {offsets = [0, 1], sizes = [8, 130], strides = [1, 1]} : vector<8x132xf32> to vector<8x130xf32>
    %5 = vector.extract_strided_slice %1 {offsets = [0, 2], sizes = [8, 130], strides = [1, 1]} : vector<8x132xf32> to vector<8x130xf32>
    %6 = tpu.concatenate %3, %4, %5 in 0 : vector<8x130xf32>, vector<8x130xf32>, vector<8x130xf32> -> vector<24x130xf32>
    %cst = arith.constant dense<0.000000e+00> : vector<8x130xf32>
    %7 = tpu.matmul %2, %6, %cst {dimension_numbers = #tpu.dot_dimension_numbers<[1], [0], [0], [1], [0, 0, 1, 1], [], []>} : vector<8x24xf32>, vector<24x130xf32>, vector<8x130xf32> -> vector<8x130xf32>
    %c0_4 = arith.constant 0 : index
    %c0_5 = arith.constant 0 : index
    %8 = vector.load %arg3[%c0_4, %c0_5] : memref<8x1xf32, #tpu.memory_space<vmem>>, vector<8x1xf32>
    %9 = vector.broadcast %8 : vector<8x1xf32> to vector<8x130xf32>
    %10 = arith.addf %7, %9 : vector<8x130xf32>
    %cst_6 = arith.constant 0.000000e+00 : f32
    %11 = vector.broadcast %cst_6 : f32 to vector<8x130xf32>
    %12 = arith.maximumf %10, %11 : vector<8x130xf32>
    %c0_7 = arith.constant 0 : index
    %c0_8 = arith.constant 0 : index
    %13 = vector.load %arg6[%c0_7, %c0_8] : memref<1x130xf32, #tpu.memory_space<vmem>>, vector<1x130xf32>
    %14 = vector.broadcast %13 : vector<1x130xf32> to vector<8x130xf32>
    %15 = arith.mulf %12, %14 : vector<8x130xf32>
    %c0_9 = arith.constant 0 : index
    %c0_10 = arith.constant 0 : index
    %16 = vector.load %arg4[%c0_9, %c0_10] : memref<16x24xf32, #tpu.memory_space<vmem>>, vector<16x24xf32>
    %17 = vector.extract_strided_slice %15 {offsets = [0, 0], sizes = [8, 128], strides = [1, 1]} : vector<8x130xf32> to vector<8x128xf32>
    %18 = vector.extract_strided_slice %15 {offsets = [0, 1], sizes = [8, 128], strides = [1, 1]} : vector<8x130xf32> to vector<8x128xf32>
    %19 = vector.extract_strided_slice %15 {offsets = [0, 2], sizes = [8, 128], strides = [1, 1]} : vector<8x130xf32> to vector<8x128xf32>
    %20 = tpu.concatenate %17, %18, %19 in 0 : vector<8x128xf32>, vector<8x128xf32>, vector<8x128xf32> -> vector<24x128xf32>
    %cst_11 = arith.constant dense<0.000000e+00> : vector<16x128xf32>
    %21 = tpu.matmul %16, %20, %cst_11 {dimension_numbers = #tpu.dot_dimension_numbers<[1], [0], [0], [1], [0, 0, 1, 1], [], []>} : vector<16x24xf32>, vector<24x128xf32>, vector<16x128xf32> -> vector<16x128xf32>
    %c0_12 = arith.constant 0 : index
    %c0_13 = arith.constant 0 : index
    %22 = vector.load %arg5[%c0_12, %c0_13] : memref<16x1xf32, #tpu.memory_space<vmem>>, vector<16x1xf32>
    %23 = vector.broadcast %22 : vector<16x1xf32> to vector<16x128xf32>
    %24 = arith.addf %21, %23 : vector<16x128xf32>
    %cst_14 = arith.constant 0.000000e+00 : f32
    %25 = vector.broadcast %cst_14 : f32 to vector<16x128xf32>
    %26 = arith.maximumf %24, %25 : vector<16x128xf32>
    %c0_15 = arith.constant 0 : index
    %c0_16 = arith.constant 0 : index
    %c0_17 = arith.constant 0 : index
    %27 = vector.load %arg7[%c0_15, %c0_16, %c0_17] : memref<1x16x128xf32, #tpu.memory_space<vmem>>, vector<1x16x128xf32>
    %28 = vector.shape_cast %27 : vector<1x16x128xf32> to vector<16x128xf32>
    %29 = vector.shape_cast %26 : vector<16x128xf32> to vector<1x16x128xf32>
    tpu.vector_store %arg7[%c0_15, %c0_16, %c0_17], %29 {strides = array<i32>} : memref<1x16x128xf32, #tpu.memory_space<vmem>>, vector<1x16x128xf32>,
    return
  }
  func.func @transform_0(%arg0: i32) -> (i32, i32, i32) {
    %c0_i32 = arith.constant 0 : i32
    %c0_i32_0 = arith.constant 0 : i32
    %c0_i32_1 = arith.constant 0 : i32
    return %arg0, %c0_i32, %c0_i32_0 : i32, i32, i32
  }
  func.func @transform_1(%arg0: i32) -> (i32, i32) {
    %c0_i32 = arith.constant 0 : i32
    %c0_i32_0 = arith.constant 0 : i32
    %c0_i32_1 = arith.constant 0 : i32
    return %c0_i32, %c0_i32_0 : i32, i32
  }
  func.func @transform_2(%arg0: i32) -> (i32, i32) {
    %c0_i32 = arith.constant 0 : i32
    %c0_i32_0 = arith.constant 0 : i32
    %c0_i32_1 = arith.constant 0 : i32
    return %c0_i32, %c0_i32_0 : i32, i32
  }
  func.func @transform_3(%arg0: i32) -> (i32, i32) {
    %c0_i32 = arith.constant 0 : i32
    %c0_i32_0 = arith.constant 0 : i32
    %c0_i32_1 = arith.constant 0 : i32
    return %c0_i32, %c0_i32_0 : i32, i32
  }
  func.func @transform_4(%arg0: i32) -> (i32, i32) {
    %c0_i32 = arith.constant 0 : i32
    %c0_i32_0 = arith.constant 0 : i32
    %c0_i32_1 = arith.constant 0 : i32
    return %c0_i32, %c0_i32_0 : i32, i32
  }
  func.func @transform_5(%arg0: i32) -> (i32, i32) {
    %c0_i32 = arith.constant 0 : i32
    %c0_i32_0 = arith.constant 0 : i32
    %c0_i32_1 = arith.constant 0 : i32
    return %c0_i32, %c0_i32_0 : i32, i32
  }
  func.func @transform_6(%arg0: i32) -> (i32, i32, i32) {
    %c0_i32 = arith.constant 0 : i32
    %c0_i32_0 = arith.constant 0 : i32
    %c0_i32_1 = arith.constant 0 : i32
    return %arg0, %c0_i32, %c0_i32_0 : i32, i32, i32
  }
}

module attributes {stable_mosaic.version = 11 : i64} {
  func.func @transfer_net_kernel(%arg0: i32, %arg1: memref<1x8x132xf32, #tpu.memory_space<vmem>>, %arg2: memref<8x24xf32, #tpu.memory_space<vmem>>, %arg3: memref<8x1xf32, #tpu.memory_space<vmem>>, %arg4: memref<16x24xf32, #tpu.memory_space<vmem>>, %arg5: memref<16x1xf32, #tpu.memory_space<vmem>>, %arg6: memref<1x130xf32, #tpu.memory_space<vmem>>, %arg7: memref<1x16x128xf32, #tpu.memory_space<vmem>>) attributes {dimension_semantics = [#tpu.dimension_semantics<parallel>], iteration_bounds = array<i64: 2>, scalar_prefetch = 0 : i64, scratch_operands = 0 : i64, tpu.core_type = #tpu.core_type<tc>, window_params = [{transform_indices = @transform_0, window_bounds = array<i64: 1, 8, 132>}, {pipeline_mode = #tpu.pipeline_mode<synchronous>, transform_indices = @transform_1, window_bounds = array<i64: 8, 24>}, {pipeline_mode = #tpu.pipeline_mode<synchronous>, transform_indices = @transform_2, window_bounds = array<i64: 8, 1>}, {pipeline_mode = #tpu.pipeline_mode<synchronous>, transform_indices = @transform_3, window_bounds = array<i64: 16, 24>}, {pipeline_mode = #tpu.pipeline_mode<synchronous>, transform_indices = @transform_4, window_bounds = array<i64: 16, 1>}, {pipeline_mode = #tpu.pipeline_mode<synchronous>, transform_indices = @transform_5, window_bounds = array<i64: 1, 130>}, {transform_indices = @transform_6, window_bounds = array<i64: 1, 16, 128>}]} {
    %c0 = arith.constant 0 : index
    %c0_0 = arith.constant 0 : index
    %c0_1 = arith.constant 0 : index
    %0 = vector.load %arg1[%c0, %c0_0, %c0_1] : memref<1x8x132xf32, #tpu.memory_space<vmem>>, vector<1x8x132xf32>
    %1 = vector.shape_cast %0 : vector<1x8x132xf32> to vector<8x132xf32>
    %c0_2 = arith.constant 0 : index
    %c0_3 = arith.constant 0 : index
    %2 = vector.load %arg2[%c0_2, %c0_3] : memref<8x24xf32, #tpu.memory_space<vmem>>, vector<8x24xf32>
    %3 = vector.extract_strided_slice %1 {offsets = [0, 0], sizes = [8, 130], strides = [1, 1]} : vector<8x132xf32> to vector<8x130xf32>
    %4 = vector.extract_strided_slice %1 {offsets = [0, 1], sizes = [8, 130], strides = [1, 1]} : vector<8x132xf32> to vector<8x130xf32>
    %5 = vector.extract_strided_slice %1 {offsets = [0, 2], sizes = [8, 130], strides = [1, 1]} : vector<8x132xf32> to vector<8x130xf32>
    %6 = tpu.concatenate %3, %4, %5 in 0 : vector<8x130xf32>, vector<8x130xf32>, vector<8x130xf32> -> vector<24x130xf32>
    %cst = arith.constant dense<0.000000e+00> : vector<8x130xf32>
    %7 = tpu.matmul %2, %6, %cst {dimension_numbers = #tpu.dot_dimension_numbers<[1], [0], [0], [1], [0, 0, 1, 1], [], []>} : vector<8x24xf32>, vector<24x130xf32>, vector<8x130xf32> -> vector<8x130xf32>
    %c0_4 = arith.constant 0 : index
    %c0_5 = arith.constant 0 : index
    %8 = vector.load %arg3[%c0_4, %c0_5] : memref<8x1xf32, #tpu.memory_space<vmem>>, vector<8x1xf32>
    %9 = vector.broadcast %8 : vector<8x1xf32> to vector<8x130xf32>
    %10 = arith.addf %7, %9 : vector<8x130xf32>
    %cst_6 = arith.constant 0.000000e+00 : f32
    %11 = vector.broadcast %cst_6 : f32 to vector<8x130xf32>
    %12 = arith.maximumf %10, %11 : vector<8x130xf32>
    %c0_7 = arith.constant 0 : index
    %c0_8 = arith.constant 0 : index
    %13 = vector.load %arg6[%c0_7, %c0_8] : memref<1x130xf32, #tpu.memory_space<vmem>>, vector<1x130xf32>
    %14 = vector.broadcast %13 : vector<1x130xf32> to vector<8x130xf32>
    %15 = arith.mulf %12, %14 : vector<8x130xf32>
    %c0_9 = arith.constant 0 : index
    %c0_10 = arith.constant 0 : index
    %16 = vector.load %arg4[%c0_9, %c0_10] : memref<16x24xf32, #tpu.memory_space<vmem>>, vector<16x24xf32>
    %17 = vector.extract_strided_slice %15 {offsets = [0, 0], sizes = [8, 128], strides = [1, 1]} : vector<8x130xf32> to vector<8x128xf32>
    %18 = vector.extract_strided_slice %15 {offsets = [0, 1], sizes = [8, 128], strides = [1, 1]} : vector<8x130xf32> to vector<8x128xf32>
    %19 = vector.extract_strided_slice %15 {offsets = [0, 2], sizes = [8, 128], strides = [1, 1]} : vector<8x130xf32> to vector<8x128xf32>
    %20 = tpu.concatenate %17, %18, %19 in 0 : vector<8x128xf32>, vector<8x128xf32>, vector<8x128xf32> -> vector<24x128xf32>
    %cst_11 = arith.constant dense<0.000000e+00> : vector<16x128xf32>
    %21 = tpu.matmul %16, %20, %cst_11 {dimension_numbers = #tpu.dot_dimension_numbers<[1], [0], [0], [1], [0, 0, 1, 1], [], []>} : vector<16x24xf32>, vector<24x128xf32>, vector<16x128xf32> -> vector<16x128xf32>
    %c0_12 = arith.constant 0 : index
    %c0_13 = arith.constant 0 : index
    %22 = vector.load %arg5[%c0_12, %c0_13] : memref<16x1xf32, #tpu.memory_space<vmem>>, vector<16x1xf32>
    %23 = vector.broadcast %22 : vector<16x1xf32> to vector<16x128xf32>
    %24 = arith.addf %21, %23 : vector<16x128xf32>
    %cst_14 = arith.constant 0.000000e+00 : f32
    %25 = vector.broadcast %cst_14 : f32 to vector<16x128xf32>
    %26 = arith.maximumf %24, %25 : vector<16x128xf32>
    %c0_15 = arith.constant 0 : index
    %c0_16 = arith.constant 0 : index
    %c0_17 = arith.constant 0 : index
    %27 = vector.load %arg7[%c0_15, %c0_16, %c0_17] : memref<1x16x128xf32, #tpu.memory_space<vmem>>, vector<1x16x128xf32>
    %28 = vector.shape_cast %27 : vector<1x16x128xf32> to vector<16x128xf32>
    %29 = vector.shape_cast %26 : vector<16x128xf32> to vector<1x16x128xf32>
    tpu.vector_store %arg7[%c0_15, %c0_16, %c0_17], %29 {strides = array<i32>} : memref<1x16x128xf32, #tpu.memory_space<vmem>>, vector<1x16x128xf32>,
    return
  }
  func.func @transform_0(%arg0: i32) -> (i32, i32, i32) {
    %c0_i32 = arith.constant 0 : i32
    %c0_i32_0 = arith.constant 0 : i32
    %c0_i32_1 = arith.constant 0 : i32
    return %arg0, %c0_i32, %c0_i32_0 : i32, i32, i32
  }
  func.func @transform_1(%arg0: i32) -> (i32, i32) {
    %c0_i32 = arith.constant 0 : i32
    %c0_i32_0 = arith.constant 0 : i32
    %c0_i32_1 = arith.constant 0 : i32
    return %c0_i32, %c0_i32_0 : i32, i32
  }
  func.func @transform_2(%arg0: i32) -> (i32, i32) {
    %c0_i32 = arith.constant 0 : i32
    %c0_i32_0 = arith.constant 0 : i32
    %c0_i32_1 = arith.constant 0 : i32
    return %c0_i32, %c0_i32_0 : i32, i32
  }
  func.func @transform_3(%arg0: i32) -> (i32, i32) {
    %c0_i32 = arith.constant 0 : i32
    %c0_i32_0 = arith.constant 0 : i32
    %c0_i32_1 = arith.constant 0 : i32
    return %c0_i32, %c0_i32_0 : i32, i32
  }
  func.func @transform_4(%arg0: i32) -> (i32, i32) {
    %c0_i32 = arith.constant 0 : i32
    %c0_i32_0 = arith.constant 0 : i32
    %c0_i32_1 = arith.constant 0 : i32
    return %c0_i32, %c0_i32_0 : i32, i32
  }
  func.func @transform_5(%arg0: i32) -> (i32, i32) {
    %c0_i32 = arith.constant 0 : i32
    %c0_i32_0 = arith.constant 0 : i32
    %c0_i32_1 = arith.constant 0 : i32
    return %c0_i32, %c0_i32_0 : i32, i32
  }
  func.func @transform_6(%arg0: i32) -> (i32, i32, i32) {
    %c0_i32 = arith.constant 0 : i32
    %c0_i32_0 = arith.constant 0 : i32
    %c0_i32_1 = arith.constant 0 : i32
    return %arg0, %c0_i32, %c0_i32_0 : i32, i32, i32
  }
}

</mosaic_0001>

<llo_original>
// kernel: tpu_custom_call.1
$region0: #{tpu_custom_call.1}
  #allocation0 [shape = 'u32[]', space=smem, size = 0x4, offset = 0x4, fixed_abs, tag = 'smem constant byte address 0x4 - core index']
  #allocation1 [shape = 'u32[144,128]{1,0:T(1,128)}', space=vmem, size = 0x12000, scoped, tag = 'internal scratch']
  %s0 = inlined_call_operand.hbm [shape: f32[2,8,132], index: 0, kind: input, shape index: {}]
  %s1 = inlined_call_operand.vmem [shape: f32[8,24], index: 1, kind: input, shape index: {}]
  %s2 = inlined_call_operand.vmem [shape: f32[8,1], index: 2, kind: input, shape index: {}]
  %s3 = inlined_call_operand.vmem [shape: f32[16,24], index: 3, kind: input, shape index: {}]
  %s4 = inlined_call_operand.vmem [shape: f32[16,1], index: 4, kind: input, shape index: {}]
  %s5 = inlined_call_operand.vmem [shape: f32[1,130], index: 5, kind: input, shape index: {}]
  %s6 = inlined_call_operand.hbm [shape: f32[2,16,128], index: 6, kind: output, shape index: {}]
  %s7 = sld [smem:[#allocation0]]
  $region61: #{tpu_custom_call.1} parent=0
    _
  %s9 = ssub.s32 1, %s7
  %s10 = scalar_select 0, %s9, %s7
  $region1: #{tpu_custom_call.1} parent=0
    #allocation2 [shape = 'u8[16384]{0}', space=vmem, size = 0x4000, scoped, tag = 'input window, operand 0']
    #allocation3 [shape = 's32[2]{0}', space=sflag, size = 0x8, scoped, tag = 'scoped memory for tpu_custom_call.1']
    #allocation4 [shape = 's32[2]{0}', space=sflag, size = 0x8, scoped, tag = 'scoped memory for tpu_custom_call.1']
    #allocation5 [shape = 'u8[16384]{0}', space=vmem, size = 0x4000, scoped, tag = 'output window, operand 0']
    %11 = vsyncpa [#allocation3], 0
    %s12 = scalar_lea.sflag [#allocation3], 1
    %13 = vsyncpa %s12, 0
    %14 = vsyncpa [#allocation4], 0
    %s15 = scalar_lea.sflag [#allocation4], 1
    %16 = vsyncpa %s15, 0
    loop: start=0, step=1, limit=4
    $region2: #{tpu_custom_call.1} parent=1 // loop_pre_header
      _
    $region3: #{tpu_custom_call.1} parent=1 // loop_header
      %s18 = sphi 0, %s22
      %p19 = scmp.ge.s32.totalorder %s18, 4
      %s28 = sphi 0, %s30
      %s31 = sphi 0, %s28
      %s32 = sphi 0, %s31
      %s48 = sphi 0, %s32
      %s52 = sphi 0, %s52
      %s54 = sphi 0, %s52
      %s55 = sphi 0, %s54
      %s69 = sphi 0, %s55
      %s73 = sphi 0, %s73
      %s75 = sphi 0, %s73
      %s76 = sphi 0, %s75
      %s90 = sphi 0, %s76
      %s94 = sphi 0, %s94
      %s96 = sphi 0, %s94
      %s97 = sphi 0, %s96
      %s111 = sphi 0, %s97
      %s115 = sphi 0, %s115
      %s117 = sphi 0, %s115
      %s118 = sphi 0, %s117
      %s132 = sphi 0, %s118
      %s136 = sphi 0, %s136
      %s138 = sphi 0, %s136
      %s139 = sphi 0, %s138
      %s153 = sphi 0, %s139
      %s159 = sphi 0, %s161
      %s162 = sphi 0, %s159
      %s163 = sphi 0, %s162
      %s179 = sphi 0, %s163
    $region4: #{tpu_custom_call.1} parent=1 // loop_header_branch
      %21 = sbr.rel (%p19) target = $region8
    $region5: #{tpu_custom_call.1} parent=1 // loop_body
      %s23 = ssub.s32 %s18, 1
      %s24 = ssub.s32 %s18, 2
      %s25 = sadd.s32 %s18, 1
      %s26 = ssub.s32 %s18, %s25
      %p27 = scmp.eq.s32.totalorder %s26, 0
      %s29 = sadd.s32 %s28, 1
      %s30 = scalar_select %p27, %s28, %s29
      %p33 = pneg %p27
      %p34 = scmp.eq.s32.totalorder %s18, 1
      %p35 = por %p33, %p34
      %p36 = scmp.ne.s32.totalorder %s28, %s31
      %p37 = scmp.eq.s32.totalorder %s18, 0
      %p38 = por %p36, %p37
      %p39 = scmp.ne.s32.totalorder %s28, %s31
      %p40 = scmp.eq.s32.totalorder %s23, 1
      %p41 = por %p39, %p40
      %p42 = scmp.ne.s32.totalorder %s31, %s32
      %p43 = scmp.eq.s32.totalorder %s23, 0
      %p44 = por %p42, %p43
      %p45 = scmp.ne.s32.totalorder %s31, %s32
      %p46 = scmp.eq.s32.totalorder %s24, 1
      %p47 = por %p45, %p46
      %p49 = scmp.ne.s32.totalorder %s32, %s48
      %p50 = scmp.eq.s32.totalorder %s24, 0
      %p51 = por %p49, %p50
      %s53 = sadd.s32 %s52, 1
      %p56 = scmp.eq.s32.totalorder %s18, 1
      %p57 = scmp.ne.s32.totalorder %s52, %s54
      %p58 = scmp.eq.s32.totalorder %s18, 0
      %p59 = por %p57, %p58
      %p60 = scmp.ne.s32.totalorder %s52, %s54
      %p61 = scmp.eq.s32.totalorder %s23, 1
      %p62 = por %p60, %p61
      %p63 = scmp.ne.s32.totalorder %s54, %s55
      %p64 = scmp.eq.s32.totalorder %s23, 0
      %p65 = por %p63, %p64
      %p66 = scmp.ne.s32.totalorder %s54, %s55
      %p67 = scmp.eq.s32.totalorder %s24, 1
      %p68 = por %p66, %p67
      %p70 = scmp.ne.s32.totalorder %s55, %s69
      %p71 = scmp.eq.s32.totalorder %s24, 0
      %p72 = por %p70, %p71
      %s74 = sadd.s32 %s73, 1
      %p77 = scmp.eq.s32.totalorder %s18, 1
      %p78 = scmp.ne.s32.totalorder %s73, %s75
      %p79 = scmp.eq.s32.totalorder %s18, 0
      %p80 = por %p78, %p79
      %p81 = scmp.ne.s32.totalorder %s73, %s75
      %p82 = scmp.eq.s32.totalorder %s23, 1
      %p83 = por %p81, %p82
      %p84 = scmp.ne.s32.totalorder %s75, %s76
      %p85 = scmp.eq.s32.totalorder %s23, 0
      %p86 = por %p84, %p85
      %p87 = scmp.ne.s32.totalorder %s75, %s76
      %p88 = scmp.eq.s32.totalorder %s24, 1
      %p89 = por %p87, %p88
      %p91 = scmp.ne.s32.totalorder %s76, %s90
      %p92 = scmp.eq.s32.totalorder %s24, 0
      %p93 = por %p91, %p92
      %s95 = sadd.s32 %s94, 1
      %p98 = scmp.eq.s32.totalorder %s18, 1
      %p99 = scmp.ne.s32.totalorder %s94, %s96
      %p100 = scmp.eq.s32.totalorder %s18, 0
      %p101 = por %p99, %p100
      %p102 = scmp.ne.s32.totalorder %s94, %s96
      %p103 = scmp.eq.s32.totalorder %s23, 1
      %p104 = por %p102, %p103
      %p105 = scmp.ne.s32.totalorder %s96, %s97
      %p106 = scmp.eq.s32.totalorder %s23, 0
      %p107 = por %p105, %p106
      %p108 = scmp.ne.s32.totalorder %s96, %s97
      %p109 = scmp.eq.s32.totalorder %s24, 1
      %p110 = por %p108, %p109
      %p112 = scmp.ne.s32.totalorder %s97, %s111
      %p113 = scmp.eq.s32.totalorder %s24, 0
      %p114 = por %p112, %p113
      %s116 = sadd.s32 %s115, 1
      %p119 = scmp.eq.s32.totalorder %s18, 1
      %p120 = scmp.ne.s32.totalorder %s115, %s117
      %p121 = scmp.eq.s32.totalorder %s18, 0
      %p122 = por %p120, %p121
      %p123 = scmp.ne.s32.totalorder %s115, %s117
      %p124 = scmp.eq.s32.totalorder %s23, 1
      %p125 = por %p123, %p124
      %p126 = scmp.ne.s32.totalorder %s117, %s118
      %p127 = scmp.eq.s32.totalorder %s23, 0
      %p128 = por %p126, %p127
      %p129 = scmp.ne.s32.totalorder %s117, %s118
      %p130 = scmp.eq.s32.totalorder %s24, 1
      %p131 = por %p129, %p130
      %p133 = scmp.ne.s32.totalorder %s118, %s132
      %p134 = scmp.eq.s32.totalorder %s24, 0
      %p135 = por %p133, %p134
      %s137 = sadd.s32 %s136, 1
      %p140 = scmp.eq.s32.totalorder %s18, 1
      %p141 = scmp.ne.s32.totalorder %s136, %s138
      %p142 = scmp.eq.s32.totalorder %s18, 0
      %p143 = por %p141, %p142
      %p144 = scmp.ne.s32.totalorder %s136, %s138
      %p145 = scmp.eq.s32.totalorder %s23, 1
      %p146 = por %p144, %p145
      %p147 = scmp.ne.s32.totalorder %s138, %s139
      %p148 = scmp.eq.s32.totalorder %s23, 0
      %p149 = por %p147, %p148
      %p150 = scmp.ne.s32.totalorder %s138, %s139
      %p151 = scmp.eq.s32.totalorder %s24, 1
      %p152 = por %p150, %p151
      %p154 = scmp.ne.s32.totalorder %s139, %s153
      %p155 = scmp.eq.s32.totalorder %s24, 0
      %p156 = por %p154, %p155
      %s157 = ssub.s32 %s18, %s25
      %p158 = scmp.eq.s32.totalorder %s157, 0
      %s160 = sadd.s32 %s159, 1
      %s161 = scalar_select %p158, %s159, %s160
      %p164 = pneg %p158
      %p165 = scmp.eq.s32.totalorder %s18, 1
      %p166 = por %p164, %p165
      %p167 = scmp.ne.s32.totalorder %s159, %s162
      %p168 = scmp.eq.s32.totalorder %s18, 0
      %p169 = por %p167, %p168
      %p170 = scmp.ne.s32.totalorder %s159, %s162
      %p171 = scmp.eq.s32.totalorder %s23, 1
      %p172 = por %p170, %p171
      %p173 = scmp.ne.s32.totalorder %s162, %s163
      %p174 = scmp.eq.s32.totalorder %s23, 0
      %p175 = por %p173, %p174
      %p176 = scmp.ne.s32.totalorder %s162, %s163
      %p177 = scmp.eq.s32.totalorder %s24, 1
      %p178 = por %p176, %p177
      %p180 = scmp.ne.s32.totalorder %s163, %s179
      %p181 = scmp.eq.s32.totalorder %s24, 0
      %p182 = por %p180, %p181
      %p183 = scmp.le.s32.totalorder 1, %s18
      %p184 = scmp.lt.s32.totalorder %s18, 3
      %p185 = pnand %p183, %p184
      %p186 = pneg %p185
      // Predicated region
      $region9: #{tpu_custom_call.1} parent=5 // pred_check
        _
      $region10: #{tpu_custom_call.1} parent=5 // pred_check_branch
        %188 = sbr.rel (%p185) target = $region12
      $region11: #{tpu_custom_call.1} parent=5 // pred_region
        %s189 = ssub.s32 %s18, 1
        // Predicated region
        $region13: #{tpu_custom_call.1} parent=11 // pred_check
          %p190 = pneg %p65
        $region14: #{tpu_custom_call.1} parent=11 // pred_check_branch
          %192 = sbr.rel (%p190) target = $region16
        $region15: #{tpu_custom_call.1} parent=11 // pred_region
          _
        $region16: #{tpu_custom_call.1} parent=11 // pred_fallthru
          _
        // Predicated region
        $region17: #{tpu_custom_call.1} parent=11 // pred_check
          %p193 = pneg %p86
        $region18: #{tpu_custom_call.1} parent=11 // pred_check_branch
          %195 = sbr.rel (%p193) target = $region20
        $region19: #{tpu_custom_call.1} parent=11 // pred_region
          _
        $region20: #{tpu_custom_call.1} parent=11 // pred_fallthru
          _
        // Predicated region
        $region21: #{tpu_custom_call.1} parent=11 // pred_check
          %p196 = pneg %p107
        $region22: #{tpu_custom_call.1} parent=11 // pred_check_branch
          %198 = sbr.rel (%p196) target = $region24
        $region23: #{tpu_custom_call.1} parent=11 // pred_region
          _
        $region24: #{tpu_custom_call.1} parent=11 // pred_fallthru
          _
        // Predicated region
        $region25: #{tpu_custom_call.1} parent=11 // pred_check
          %p199 = pneg %p128
        $region26: #{tpu_custom_call.1} parent=11 // pred_check_branch
          %201 = sbr.rel (%p199) target = $region28
        $region27: #{tpu_custom_call.1} parent=11 // pred_region
          _
        $region28: #{tpu_custom_call.1} parent=11 // pred_fallthru
          _
        // Predicated region
        $region29: #{tpu_custom_call.1} parent=11 // pred_check
          %p202 = pneg %p149
        $region30: #{tpu_custom_call.1} parent=11 // pred_check_branch
          %204 = sbr.rel (%p202) target = $region32
        $region31: #{tpu_custom_call.1} parent=11 // pred_region
          _
        $region32: #{tpu_custom_call.1} parent=11 // pred_fallthru
          _
      $region12: #{tpu_custom_call.1} parent=5 // pred_fallthru
        _
      %p205 = scmp.lt.s32.totalorder %s18, 2
      // Predicated region
      $region33: #{tpu_custom_call.1} parent=5 // pred_check
        %p206 = pneg %p205
      $region34: #{tpu_custom_call.1} parent=5 // pred_check_branch
        %208 = sbr.rel (%p206) target = $region36
      $region35: #{tpu_custom_call.1} parent=5 // pred_region
        // Predicated region
        $region37: #{tpu_custom_call.1} parent=35 // pred_check
          %p209 = pneg %p38
        $region38: #{tpu_custom_call.1} parent=35 // pred_check_branch
          %211 = sbr.rel (%p209) target = $region40
        $region39: #{tpu_custom_call.1} parent=35 // pred_region
          %s212 = sand.u32 %s28, 1
          %s213 = scalar_lea.sflag [#allocation3], %s212
          %s214 = sand.u32 %s28, 1
          %s215 = smul.addr %s214, 16
          %s216 = scalar_lea.vmem [#allocation2], %s215
          %s218 = ssub.s32 256, 256
          %219 = vsyncadd %s213, %s218
          %s220 = smul.addr %s18, 2
          %s221 = smul.addr %s220, 128
          %s222 = scalar_lea.hbm %s0, %s221
          %s224 = sshll.u32 %s216, 4
          %s225 = int_to_ptr.vmem [resolvable:$true] %s224
          %227 = dma.hbm_to_vmem [thread:$0]  %s222, 256, %s225, %s213
        $region40: #{tpu_custom_call.1} parent=35 // pred_fallthru
          _
      $region36: #{tpu_custom_call.1} parent=5 // pred_fallthru
        _
      %p228 = scmp.le.s32.totalorder 1, %s18
      %p229 = scmp.lt.s32.totalorder %s18, 3
      %p230 = pnand %p228, %p229
      %p231 = pneg %p230
      // Predicated region
      $region41: #{tpu_custom_call.1} parent=5 // pred_check
        _
      $region42: #{tpu_custom_call.1} parent=5 // pred_check_branch
        %233 = sbr.rel (%p230) target = $region44
      $region43: #{tpu_custom_call.1} parent=5 // pred_region
        %s234 = ssub.s32 %s18, 1
        %s235 = sand.u32 %s31, 1
        %s236 = scalar_lea.sflag [#allocation3], %s235
        %s237 = sand.u32 %s31, 1
        %s238 = smul.addr %s237, 16
        %s239 = scalar_lea.vmem [#allocation2], %s238
        // Predicated region
        $region45: #{tpu_custom_call.1} parent=43 // pred_check
          %p240 = pneg %p44
        $region46: #{tpu_custom_call.1} parent=43 // pred_check_branch
          %242 = sbr.rel (%p240) target = $region48
        $region47: #{tpu_custom_call.1} parent=43 // pred_region
          %243 = dma.done %s236, 256
        $region48: #{tpu_custom_call.1} parent=43 // pred_fallthru
          _
        %s244 = sand.u32 %s31, 1
        %s245 = scalar_lea.sflag [#allocation3], %s244
        %s246 = sand.u32 %s31, 1
        %s247 = smul.addr %s246, 16
        %s248 = scalar_lea.vmem [#allocation2], %s247
        %p249 = pneg %p44
        %p250 = pneg %p41
        %p251 = pneg %p65
        %p252 = pneg %p62
        %p253 = pneg %p86
        %p254 = pneg %p83
        %p255 = pneg %p107
        %p256 = pneg %p104
        %p257 = pneg %p128
        %p258 = pneg %p125
        %p259 = pneg %p149
        %p260 = pneg %p146
        %p261 = pneg %p175
        %p262 = pneg %p172
        %s263 = sand.u32 %s162, 1
        %s264 = scalar_lea.sflag [#allocation4], %s263
        %s265 = sand.u32 %s162, 1
        %s266 = smul.addr %s265, 16
        %s267 = scalar_lea.vmem [#allocation5], %s266
        %v268 = vld [vmem:[%s239] sm:$0xff]
        %v269 = vld [vmem:[%s239 + $0x8] sm:$0xff]
        %v270 = vld [vmem:[%s1] sm:$0xff]
        %273 = vrot.lane.b32.xlu0 %v268, 127
        %v274 = vpop.permute.xlu0 %273
        %275 = vrot.lane.b32.xlu0 %v269, 127
        %v276 = vpop.permute.xlu0 %275
        %vm277 = vcmask 1039360
        %v278 = vsel %vm277, %v274, %v276
        %281 = vrot.lane.b32.xlu0 %v268, 126
        %v282 = vpop.permute.xlu0 %281
        %283 = vrot.lane.b32.xlu0 %v269, 126
        %v284 = vpop.permute.xlu0 %283
        %vm285 = vcmask 1031168
        %v286 = vsel %vm285, %v282, %v284
        %v289 = vld [vmem:[%s2] sm:$0xff]
        %291 = vset.pattern.permute.xlu0 0
        %292 = vperm.xlu0 %291, %v289
        %v293 = vpop.permute.xlu0 %292
        %vm295 = vcmask 195584
        %v297 = vsel %vm295, %v270, 0
        %299 = vmatprep.subr.mxu0 0.0
        %300 = vmatpush1.msra.mxu0 0.0
        %301 = vmatprep.subr.mxu0 0.0
        %302 = vmatpush1.msra.mxu0 0.0
        %303 = vmatprep.subr.mxu0 0.0
        %304 = vmatpush1.msra.mxu0 0.0
        %305 = vmatprep.subr.mxu0 0.0
        %306 = vmatpush1.msra.mxu0 0.0
        %307 = vmatprep.subr.mxu0 0.0
        %308 = vmatpush1.msra.mxu0 0.0
        %309 = vmatprep.subr.mxu0 0.0
        %310 = vmatpush1.msra.mxu0 0.0
        %311 = vmatprep.subr.mxu0 0.0
        %312 = vmatpush1.msra.mxu0 0.0
        %313 = vmatprep.subr.mxu0 0.0
        %314 = vmatpush1.msra.mxu0 0.0
        %315 = vmatprep.subr.mxu0 0.0
        %316 = vmatpush1.msra.mxu0 0.0
        %317 = vmatprep.subr.mxu0 0.0
        %318 = vmatpush1.msra.mxu0 0.0
        %319 = vmatprep.subr.mxu0 0.0
        %320 = vmatpush1.msra.mxu0 0.0
        %321 = vmatprep.subr.mxu0 0.0
        %322 = vmatpush1.msra.mxu0 0.0
        %323 = vmatprep.subr.mxu0 0.0
        %324 = vmatpush1.msra.mxu0 0.0
        %325 = vmatprep.subr.mxu0 %v284
        %326 = vmatpush1.msra.mxu0 %v286
        %327 = vmatprep.subr.mxu0 %v276
        %328 = vmatpush1.msra.mxu0 %v278
        %329 = vmatprep.subr.mxu0 %v269
        %330 = vmatpush1.msra.mxu0 %v268
        %331 = vmatprep.subr.mxu0 0.0
        %332 = vmatpush2.msra.mxu0 0.0
        %333 = vmatprep.subr.mxu0 0.0
        %334 = vmatpush2.msra.mxu0 0.0
        %335 = vmatprep.subr.mxu0 0.0
        %336 = vmatpush2.msra.mxu0 0.0
        %337 = vmatprep.subr.mxu0 0.0
        %338 = vmatpush2.msra.mxu0 0.0
        %339 = vmatprep.subr.mxu0 0.0
        %340 = vmatpush2.msra.mxu0 0.0
        %341 = vmatprep.subr.mxu0 0.0
        %342 = vmatpush2.msra.mxu0 0.0
        %343 = vmatprep.subr.mxu0 0.0
        %344 = vmatpush2.msra.mxu0 0.0
        %345 = vmatprep.subr.mxu0 0.0
        %346 = vmatpush2.msra.mxu0 0.0
        %347 = vmatprep.subr.mxu0 0.0
        %348 = vmatpush2.msra.mxu0 0.0
        %349 = vmatprep.subr.mxu0 0.0
        %350 = vmatpush2.msra.mxu0 0.0
        %351 = vmatprep.subr.mxu0 0.0
        %352 = vmatpush2.msra.mxu0 0.0
        %353 = vmatprep.subr.mxu0 0.0
        %354 = vmatpush2.msra.mxu0 0.0
        %355 = vmatprep.subr.mxu0 0.0
        %356 = vmatpush2.msra.mxu0 0.0
        %357 = vmatprep.subr.mxu0 0.0
        %358 = vmatpush2.msra.mxu0 0.0
        %359 = vmatprep.subr.mxu0 0.0
        %360 = vmatpush2.msra.mxu0 0.0
        %361 = vmatprep.subr.mxu0 0.0
        %362 = vmatpush2.msra.mxu0 0.0
        %363 = vmatprep.mubr.f32.mxu0 0.0
        %364 = vmatmul.mubr.f32.gmra.mxu0 %v297
        %v365 = vpop.f32.mrf.mxu0
        %v366 = vadd.f32 %v293, %v365
        %v367 = vpop.f32.mrf.mxu0
        %v368 = vadd.f32 %v293, %v367
        %369 = vdwg.mxu0
        %v370 = vmax.f32 %v366, 0.0
        %v371 = vmax.f32 %v368, 0.0
        %v372 = vld [vmem:[%s5] sm:$0x3]
        %v374 = vlaneseq
        %v375 = vshrl.u32 %v374, 7
        %v376 = vsub.s32 0, %v375
        %v377 = vrot.slane %v372, %v376
        %v378 = vlaneseq
        %v379 = vshrl.u32 %v378, 7
        %v380 = vsub.s32 1, %v379
        %v381 = vrot.slane %v372, %v380
        %v384 = vmul.f32 %v370, %v377
        %v385 = vmul.f32 %v371, %v381
        %v386 = vld [vmem:[%s3] sm:$0xff]
        %v387 = vld [vmem:[%s3 + $0x8] sm:$0xff]
        %390 = vrot.lane.b32.xlu0 %v384, 127
        %v391 = vpop.permute.xlu0 %390
        %392 = vrot.lane.b32.xlu0 %v385, 127
        %v393 = vpop.permute.xlu0 %392
        %v394 = vsel %vm277, %v391, %v393
        %396 = vrot.lane.b32.xlu0 %v384, 126
        %v397 = vpop.permute.xlu0 %396
        %398 = vrot.lane.b32.xlu0 %v385, 126
        %v399 = vpop.permute.xlu0 %398
        %v400 = vsel %vm285, %v397, %v399
        %v402 = vld [vmem:[%s4] sm:$0xff]
        %v403 = vld [vmem:[%s4 + $0x8] sm:$0xff]
        %405 = vset.pattern.permute.xlu0 0
        %406 = vperm.xlu0 %405, %v402
        %v407 = vpop.permute.xlu0 %406
        %410 = vset.pattern.permute.xlu0 0
        %411 = vperm.xlu0 %410, %v403
        %v412 = vpop.permute.xlu0 %411
        %v415 = vsel %vm295, %v386, 0
        %v418 = vsel %vm295, %v387, 0
        %420 = vmatprep.subr.mxu0 0.0
        %421 = vmatpush1.msra.mxu0 0.0
        %422 = vmatprep.subr.mxu0 0.0
        %423 = vmatpush1.msra.mxu0 0.0
        %424 = vmatprep.subr.mxu0 0.0
        %425 = vmatpush1.msra.mxu0 0.0
        %426 = vmatprep.subr.mxu0 0.0
        %427 = vmatpush1.msra.mxu0 0.0
        %428 = vmatprep.subr.mxu0 0.0
        %429 = vmatpush1.msra.mxu0 0.0
        %430 = vmatprep.subr.mxu0 0.0
        %431 = vmatpush1.msra.mxu0 0.0
        %432 = vmatprep.subr.mxu0 0.0
        %433 = vmatpush1.msra.mxu0 0.0
        %434 = vmatprep.subr.mxu0 0.0
        %435 = vmatpush1.msra.mxu0 0.0
        %436 = vmatprep.subr.mxu0 0.0
        %437 = vmatpush1.msra.mxu0 0.0
        %438 = vmatprep.subr.mxu0 0.0
        %439 = vmatpush1.msra.mxu0 0.0
        %440 = vmatprep.subr.mxu0 0.0
        %441 = vmatpush1.msra.mxu0 0.0
        %442 = vmatprep.subr.mxu0 0.0
        %443 = vmatpush1.msra.mxu0 0.0
        %444 = vmatprep.subr.mxu0 0.0
        %445 = vmatpush1.msra.mxu0 0.0
        %446 = vmatprep.subr.mxu0 0.0
        %447 = vmatpush1.msra.mxu0 %v400
        %448 = vmatprep.subr.mxu0 0.0
        %449 = vmatpush1.msra.mxu0 %v394
        %450 = vmatprep.subr.mxu0 0.0
        %451 = vmatpush1.msra.mxu0 %v384
        %452 = vmatprep.subr.mxu0 0.0
        %453 = vmatpush2.msra.mxu0 0.0
        %454 = vmatprep.subr.mxu0 0.0
        %455 = vmatpush2.msra.mxu0 0.0
        %456 = vmatprep.subr.mxu0 0.0
        %457 = vmatpush2.msra.mxu0 0.0
        %458 = vmatprep.subr.mxu0 0.0
        %459 = vmatpush2.msra.mxu0 0.0
        %460 = vmatprep.subr.mxu0 0.0
        %461 = vmatpush2.msra.mxu0 0.0
        %462 = vmatprep.subr.mxu0 0.0
        %463 = vmatpush2.msra.mxu0 0.0
        %464 = vmatprep.subr.mxu0 0.0
        %465 = vmatpush2.msra.mxu0 0.0
        %466 = vmatprep.subr.mxu0 0.0
        %467 = vmatpush2.msra.mxu0 0.0
        %468 = vmatprep.subr.mxu0 0.0
        %469 = vmatpush2.msra.mxu0 0.0
        %470 = vmatprep.subr.mxu0 0.0
        %471 = vmatpush2.msra.mxu0 0.0
        %472 = vmatprep.subr.mxu0 0.0
        %473 = vmatpush2.msra.mxu0 0.0
        %474 = vmatprep.subr.mxu0 0.0
        %475 = vmatpush2.msra.mxu0 0.0
        %476 = vmatprep.subr.mxu0 0.0
        %477 = vmatpush2.msra.mxu0 0.0
        %478 = vmatprep.subr.mxu0 0.0
        %479 = vmatpush2.msra.mxu0 0.0
        %480 = vmatprep.subr.mxu0 0.0
        %481 = vmatpush2.msra.mxu0 0.0
        %482 = vmatprep.subr.mxu0 0.0
        %483 = vmatpush2.msra.mxu0 0.0
        %484 = vmatprep.mubr.f32.mxu0 0.0
        %485 = vmatmul.mubr.f32.gmra.mxu0 %v415
        %v486 = vpop.f32.mrf.mxu0
        %v487 = vadd.f32 %v407, %v486
        %v488 = vpop.f32.mrf.mxu0
        %489 = vmatprep.mubr.f32.mxu0 0.0
        %490 = vmatmul.mubr.f32.gmra.mxu0 %v418
        %v491 = vpop.f32.mrf.mxu0
        %v492 = vadd.f32 %v412, %v491
        %v493 = vpop.f32.mrf.mxu0
        %494 = vdwg.mxu0
        %v495 = vmax.f32 %v487, 0.0
        %v496 = vmax.f32 %v492, 0.0
        %497 = vst [vmem:[%s267] sm:$0xff] %v495
        %498 = vst [vmem:[%s267 + $0x8] sm:$0xff] %v496
        %s499 = sand.u32 %s162, 1
        %s500 = scalar_lea.sflag [#allocation4], %s499
        %s501 = sand.u32 %s162, 1
        %s502 = smul.addr %s501, 16
        %s503 = scalar_lea.vmem [#allocation5], %s502
        // Predicated region
        $region49: #{tpu_custom_call.1} parent=43 // pred_check
          %p504 = pneg %p172
        $region50: #{tpu_custom_call.1} parent=43 // pred_check_branch
          %506 = sbr.rel (%p504) target = $region52
        $region51: #{tpu_custom_call.1} parent=43 // pred_region
          %s508 = ssub.s32 256, 256
          %509 = vsyncadd %s500, %s508
          %s510 = smul.addr %s23, 2
          %s511 = smul.addr %s510, 128
          %s512 = scalar_lea.hbm %s6, %s511
          %s513 = sshll.u32 %s503, 4
          %s514 = int_to_ptr.vmem [resolvable:$true] %s513
          %519 = dma.vmem_to_hbm [thread:$0]  %s514, 256, %s512, %s500, 128, 128, 8
        $region52: #{tpu_custom_call.1} parent=43 // pred_fallthru
          _
      $region44: #{tpu_custom_call.1} parent=5 // pred_fallthru
        _
      %p520 = scmp.le.s32.totalorder 2, %s18
      // Predicated region
      $region53: #{tpu_custom_call.1} parent=5 // pred_check
        %p521 = pneg %p520
      $region54: #{tpu_custom_call.1} parent=5 // pred_check_branch
        %523 = sbr.rel (%p521) target = $region56
      $region55: #{tpu_custom_call.1} parent=5 // pred_region
        %s524 = ssub.s32 %s18, 2
        // Predicated region
        $region57: #{tpu_custom_call.1} parent=55 // pred_check
          %p525 = pneg %p178
        $region58: #{tpu_custom_call.1} parent=55 // pred_check_branch
          %527 = sbr.rel (%p525) target = $region60
        $region59: #{tpu_custom_call.1} parent=55 // pred_region
          %s528 = sand.u32 %s163, 1
          %s529 = scalar_lea.sflag [#allocation4], %s528
          %s530 = sand.u32 %s163, 1
          %s531 = smul.addr %s530, 16
          %s532 = scalar_lea.vmem [#allocation5], %s531
          %533 = dma.done %s529, 256
        $region60: #{tpu_custom_call.1} parent=55 // pred_fallthru
          _
      $region56: #{tpu_custom_call.1} parent=5 // pred_fallthru
        _
    $region6: #{tpu_custom_call.1} parent=1 // loop_footer
      %s22 = sadd.s32 1, %s18
    $region7: #{tpu_custom_call.1} parent=1 // loop_footer_branch
      %17 = sbr.rel target = $region3
    $region8: #{tpu_custom_call.1} parent=1 // loop_exit
      _
    %534 = vsyncpa [#allocation3], 1
    %s535 = scalar_lea.sflag [#allocation3], 1
    %536 = vsyncpa %s535, 1
    %537 = vsyncpa [#allocation4], 1
    %s538 = scalar_lea.sflag [#allocation4], 1
    %539 = vsyncpa %s538, 1

// kernel: tpu_custom_call.1
$region0: #{tpu_custom_call.1}
  #allocation0 [shape = 'u32[]', space=smem, size = 0x4, offset = 0x4, fixed_abs, tag = 'smem constant byte address 0x4 - core index']
  #allocation1 [shape = 'u32[144,128]{1,0:T(1,128)}', space=vmem, size = 0x12000, scoped, tag = 'internal scratch']
  %s0 = inlined_call_operand.hbm [shape: f32[2,8,132], index: 0, kind: input, shape index: {}]
  %s1 = inlined_call_operand.vmem [shape: f32[8,24], index: 1, kind: input, shape index: {}]
  %s2 = inlined_call_operand.vmem [shape: f32[8,1], index: 2, kind: input, shape index: {}]
  %s3 = inlined_call_operand.vmem [shape: f32[16,24], index: 3, kind: input, shape index: {}]
  %s4 = inlined_call_operand.vmem [shape: f32[16,1], index: 4, kind: input, shape index: {}]
  %s5 = inlined_call_operand.vmem [shape: f32[1,130], index: 5, kind: input, shape index: {}]
  %s6 = inlined_call_operand.hbm [shape: f32[2,16,128], index: 6, kind: output, shape index: {}]
  %s7 = sld [smem:[#allocation0]]
  $region61: #{tpu_custom_call.1} parent=0
    _
  %s9 = ssub.s32 1, %s7
  %s10 = scalar_select 0, %s9, %s7
  $region1: #{tpu_custom_call.1} parent=0
    #allocation2 [shape = 'u8[16384]{0}', space=vmem, size = 0x4000, scoped, tag = 'input window, operand 0']
    #allocation3 [shape = 's32[2]{0}', space=sflag, size = 0x8, scoped, tag = 'scoped memory for tpu_custom_call.1']
    #allocation4 [shape = 's32[2]{0}', space=sflag, size = 0x8, scoped, tag = 'scoped memory for tpu_custom_call.1']
    #allocation5 [shape = 'u8[16384]{0}', space=vmem, size = 0x4000, scoped, tag = 'output window, operand 0']
    %11 = vsyncpa [#allocation3], 0
    %s12 = scalar_lea.sflag [#allocation3], 1
    %13 = vsyncpa %s12, 0
    %14 = vsyncpa [#allocation4], 0
    %s15 = scalar_lea.sflag [#allocation4], 1
    %16 = vsyncpa %s15, 0
    loop: start=0, step=1, limit=4
    $region2: #{tpu_custom_call.1} parent=1 // loop_pre_header
      _
    $region3: #{tpu_custom_call.1} parent=1 // loop_header
      %s18 = sphi 0, %s22
      %p19 = scmp.ge.s32.totalorder %s18, 4
      %s28 = sphi 0, %s30
      %s31 = sphi 0, %s28
      %s32 = sphi 0, %s31
      %s48 = sphi 0, %s32
      %s52 = sphi 0, %s52
      %s54 = sphi 0, %s52
      %s55 = sphi 0, %s54
      %s69 = sphi 0, %s55
      %s73 = sphi 0, %s73
      %s75 = sphi 0, %s73
      %s76 = sphi 0, %s75
      %s90 = sphi 0, %s76
      %s94 = sphi 0, %s94
      %s96 = sphi 0, %s94
      %s97 = sphi 0, %s96
      %s111 = sphi 0, %s97
      %s115 = sphi 0, %s115
      %s117 = sphi 0, %s115
      %s118 = sphi 0, %s117
      %s132 = sphi 0, %s118
      %s136 = sphi 0, %s136
      %s138 = sphi 0, %s136
      %s139 = sphi 0, %s138
      %s153 = sphi 0, %s139
      %s159 = sphi 0, %s161
      %s162 = sphi 0, %s159
      %s163 = sphi 0, %s162
      %s179 = sphi 0, %s163
    $region4: #{tpu_custom_call.1} parent=1 // loop_header_branch
      %21 = sbr.rel (%p19) target = $region8
    $region5: #{tpu_custom_call.1} parent=1 // loop_body
      %s23 = ssub.s32 %s18, 1
      %s24 = ssub.s32 %s18, 2
      %s25 = sadd.s32 %s18, 1
      %s26 = ssub.s32 %s18, %s25
      %p27 = scmp.eq.s32.totalorder %s26, 0
      %s29 = sadd.s32 %s28, 1
      %s30 = scalar_select %p27, %s28, %s29
      %p33 = pneg %p27
      %p34 = scmp.eq.s32.totalorder %s18, 1
      %p35 = por %p33, %p34
      %p36 = scmp.ne.s32.totalorder %s28, %s31
      %p37 = scmp.eq.s32.totalorder %s18, 0
      %p38 = por %p36, %p37
      %p39 = scmp.ne.s32.totalorder %s28, %s31
      %p40 = scmp.eq.s32.totalorder %s23, 1
      %p41 = por %p39, %p40
      %p42 = scmp.ne.s32.totalorder %s31, %s32
      %p43 = scmp.eq.s32.totalorder %s23, 0
      %p44 = por %p42, %p43
      %p45 = scmp.ne.s32.totalorder %s31, %s32
      %p46 = scmp.eq.s32.totalorder %s24, 1
      %p47 = por %p45, %p46
      %p49 = scmp.ne.s32.totalorder %s32, %s48
      %p50 = scmp.eq.s32.totalorder %s24, 0
      %p51 = por %p49, %p50
      %s53 = sadd.s32 %s52, 1
      %p56 = scmp.eq.s32.totalorder %s18, 1
      %p57 = scmp.ne.s32.totalorder %s52, %s54
      %p58 = scmp.eq.s32.totalorder %s18, 0
      %p59 = por %p57, %p58
      %p60 = scmp.ne.s32.totalorder %s52, %s54
      %p61 = scmp.eq.s32.totalorder %s23, 1
      %p62 = por %p60, %p61
      %p63 = scmp.ne.s32.totalorder %s54, %s55
      %p64 = scmp.eq.s32.totalorder %s23, 0
      %p65 = por %p63, %p64
      %p66 = scmp.ne.s32.totalorder %s54, %s55
      %p67 = scmp.eq.s32.totalorder %s24, 1
      %p68 = por %p66, %p67
      %p70 = scmp.ne.s32.totalorder %s55, %s69
      %p71 = scmp.eq.s32.totalorder %s24, 0
      %p72 = por %p70, %p71
      %s74 = sadd.s32 %s73, 1
      %p77 = scmp.eq.s32.totalorder %s18, 1
      %p78 = scmp.ne.s32.totalorder %s73, %s75
      %p79 = scmp.eq.s32.totalorder %s18, 0
      %p80 = por %p78, %p79
      %p81 = scmp.ne.s32.totalorder %s73, %s75
      %p82 = scmp.eq.s32.totalorder %s23, 1
      %p83 = por %p81, %p82
      %p84 = scmp.ne.s32.totalorder %s75, %s76
      %p85 = scmp.eq.s32.totalorder %s23, 0
      %p86 = por %p84, %p85
      %p87 = scmp.ne.s32.totalorder %s75, %s76
      %p88 = scmp.eq.s32.totalorder %s24, 1
      %p89 = por %p87, %p88
      %p91 = scmp.ne.s32.totalorder %s76, %s90
      %p92 = scmp.eq.s32.totalorder %s24, 0
      %p93 = por %p91, %p92
      %s95 = sadd.s32 %s94, 1
      %p98 = scmp.eq.s32.totalorder %s18, 1
      %p99 = scmp.ne.s32.totalorder %s94, %s96
      %p100 = scmp.eq.s32.totalorder %s18, 0
      %p101 = por %p99, %p100
      %p102 = scmp.ne.s32.totalorder %s94, %s96
      %p103 = scmp.eq.s32.totalorder %s23, 1
      %p104 = por %p102, %p103
      %p105 = scmp.ne.s32.totalorder %s96, %s97
      %p106 = scmp.eq.s32.totalorder %s23, 0
      %p107 = por %p105, %p106
      %p108 = scmp.ne.s32.totalorder %s96, %s97
      %p109 = scmp.eq.s32.totalorder %s24, 1
      %p110 = por %p108, %p109
      %p112 = scmp.ne.s32.totalorder %s97, %s111
      %p113 = scmp.eq.s32.totalorder %s24, 0
      %p114 = por %p112, %p113
      %s116 = sadd.s32 %s115, 1
      %p119 = scmp.eq.s32.totalorder %s18, 1
      %p120 = scmp.ne.s32.totalorder %s115, %s117
      %p121 = scmp.eq.s32.totalorder %s18, 0
      %p122 = por %p120, %p121
      %p123 = scmp.ne.s32.totalorder %s115, %s117
      %p124 = scmp.eq.s32.totalorder %s23, 1
      %p125 = por %p123, %p124
      %p126 = scmp.ne.s32.totalorder %s117, %s118
      %p127 = scmp.eq.s32.totalorder %s23, 0
      %p128 = por %p126, %p127
      %p129 = scmp.ne.s32.totalorder %s117, %s118
      %p130 = scmp.eq.s32.totalorder %s24, 1
      %p131 = por %p129, %p130
      %p133 = scmp.ne.s32.totalorder %s118, %s132
      %p134 = scmp.eq.s32.totalorder %s24, 0
      %p135 = por %p133, %p134
      %s137 = sadd.s32 %s136, 1
      %p140 = scmp.eq.s32.totalorder %s18, 1
      %p141 = scmp.ne.s32.totalorder %s136, %s138
      %p142 = scmp.eq.s32.totalorder %s18, 0
      %p143 = por %p141, %p142
      %p144 = scmp.ne.s32.totalorder %s136, %s138
      %p145 = scmp.eq.s32.totalorder %s23, 1
      %p146 = por %p144, %p145
      %p147 = scmp.ne.s32.totalorder %s138, %s139
      %p148 = scmp.eq.s32.totalorder %s23, 0
      %p149 = por %p147, %p148
      %p150 = scmp.ne.s32.totalorder %s138, %s139
      %p151 = scmp.eq.s32.totalorder %s24, 1
      %p152 = por %p150, %p151
      %p154 = scmp.ne.s32.totalorder %s139, %s153
      %p155 = scmp.eq.s32.totalorder %s24, 0
      %p156 = por %p154, %p155
      %s157 = ssub.s32 %s18, %s25
      %p158 = scmp.eq.s32.totalorder %s157, 0
      %s160 = sadd.s32 %s159, 1
      %s161 = scalar_select %p158, %s159, %s160
      %p164 = pneg %p158
      %p165 = scmp.eq.s32.totalorder %s18, 1
      %p166 = por %p164, %p165
      %p167 = scmp.ne.s32.totalorder %s159, %s162
      %p168 = scmp.eq.s32.totalorder %s18, 0
      %p169 = por %p167, %p168
      %p170 = scmp.ne.s32.totalorder %s159, %s162
      %p171 = scmp.eq.s32.totalorder %s23, 1
      %p172 = por %p170, %p171
      %p173 = scmp.ne.s32.totalorder %s162, %s163
      %p174 = scmp.eq.s32.totalorder %s23, 0
      %p175 = por %p173, %p174
      %p176 = scmp.ne.s32.totalorder %s162, %s163
      %p177 = scmp.eq.s32.totalorder %s24, 1
      %p178 = por %p176, %p177
      %p180 = scmp.ne.s32.totalorder %s163, %s179
      %p181 = scmp.eq.s32.totalorder %s24, 0
      %p182 = por %p180, %p181
      %p183 = scmp.le.s32.totalorder 1, %s18
      %p184 = scmp.lt.s32.totalorder %s18, 3
      %p185 = pnand %p183, %p184
      %p186 = pneg %p185
      // Predicated region
      $region9: #{tpu_custom_call.1} parent=5 // pred_check
        _
      $region10: #{tpu_custom_call.1} parent=5 // pred_check_branch
        %188 = sbr.rel (%p185) target = $region12
      $region11: #{tpu_custom_call.1} parent=5 // pred_region
        %s189 = ssub.s32 %s18, 1
        // Predicated region
        $region13: #{tpu_custom_call.1} parent=11 // pred_check
          %p190 = pneg %p65
        $region14: #{tpu_custom_call.1} parent=11 // pred_check_branch
          %192 = sbr.rel (%p190) target = $region16
        $region15: #{tpu_custom_call.1} parent=11 // pred_region
          _
        $region16: #{tpu_custom_call.1} parent=11 // pred_fallthru
          _
        // Predicated region
        $region17: #{tpu_custom_call.1} parent=11 // pred_check
          %p193 = pneg %p86
        $region18: #{tpu_custom_call.1} parent=11 // pred_check_branch
          %195 = sbr.rel (%p193) target = $region20
        $region19: #{tpu_custom_call.1} parent=11 // pred_region
          _
        $region20: #{tpu_custom_call.1} parent=11 // pred_fallthru
          _
        // Predicated region
        $region21: #{tpu_custom_call.1} parent=11 // pred_check
          %p196 = pneg %p107
        $region22: #{tpu_custom_call.1} parent=11 // pred_check_branch
          %198 = sbr.rel (%p196) target = $region24
        $region23: #{tpu_custom_call.1} parent=11 // pred_region
          _
        $region24: #{tpu_custom_call.1} parent=11 // pred_fallthru
          _
        // Predicated region
        $region25: #{tpu_custom_call.1} parent=11 // pred_check
          %p199 = pneg %p128
        $region26: #{tpu_custom_call.1} parent=11 // pred_check_branch
          %201 = sbr.rel (%p199) target = $region28
        $region27: #{tpu_custom_call.1} parent=11 // pred_region
          _
        $region28: #{tpu_custom_call.1} parent=11 // pred_fallthru
          _
        // Predicated region
        $region29: #{tpu_custom_call.1} parent=11 // pred_check
          %p202 = pneg %p149
        $region30: #{tpu_custom_call.1} parent=11 // pred_check_branch
          %204 = sbr.rel (%p202) target = $region32
        $region31: #{tpu_custom_call.1} parent=11 // pred_region
          _
        $region32: #{tpu_custom_call.1} parent=11 // pred_fallthru
          _
      $region12: #{tpu_custom_call.1} parent=5 // pred_fallthru
        _
      %p205 = scmp.lt.s32.totalorder %s18, 2
      // Predicated region
      $region33: #{tpu_custom_call.1} parent=5 // pred_check
        %p206 = pneg %p205
      $region34: #{tpu_custom_call.1} parent=5 // pred_check_branch
        %208 = sbr.rel (%p206) target = $region36
      $region35: #{tpu_custom_call.1} parent=5 // pred_region
        // Predicated region
        $region37: #{tpu_custom_call.1} parent=35 // pred_check
          %p209 = pneg %p38
        $region38: #{tpu_custom_call.1} parent=35 // pred_check_branch
          %211 = sbr.rel (%p209) target = $region40
        $region39: #{tpu_custom_call.1} parent=35 // pred_region
          %s212 = sand.u32 %s28, 1
          %s213 = scalar_lea.sflag [#allocation3], %s212
          %s214 = sand.u32 %s28, 1
          %s215 = smul.addr %s214, 16
          %s216 = scalar_lea.vmem [#allocation2], %s215
          %s218 = ssub.s32 256, 256
          %219 = vsyncadd %s213, %s218
          %s220 = smul.addr %s18, 2
          %s221 = smul.addr %s220, 128
          %s222 = scalar_lea.hbm %s0, %s221
          %s224 = sshll.u32 %s216, 4
          %s225 = int_to_ptr.vmem [resolvable:$true] %s224
          %227 = dma.hbm_to_vmem [thread:$0]  %s222, 256, %s225, %s213
        $region40: #{tpu_custom_call.1} parent=35 // pred_fallthru
          _
      $region36: #{tpu_custom_call.1} parent=5 // pred_fallthru
        _
      %p228 = scmp.le.s32.totalorder 1, %s18
      %p229 = scmp.lt.s32.totalorder %s18, 3
      %p230 = pnand %p228, %p229
      %p231 = pneg %p230
      // Predicated region
      $region41: #{tpu_custom_call.1} parent=5 // pred_check
        _
      $region42: #{tpu_custom_call.1} parent=5 // pred_check_branch
        %233 = sbr.rel (%p230) target = $region44
      $region43: #{tpu_custom_call.1} parent=5 // pred_region
        %s234 = ssub.s32 %s18, 1
        %s235 = sand.u32 %s31, 1
        %s236 = scalar_lea.sflag [#allocation3], %s235
        %s237 = sand.u32 %s31, 1
        %s238 = smul.addr %s237, 16
        %s239 = scalar_lea.vmem [#allocation2], %s238
        // Predicated region
        $region45: #{tpu_custom_call.1} parent=43 // pred_check
          %p240 = pneg %p44
        $region46: #{tpu_custom_call.1} parent=43 // pred_check_branch
          %242 = sbr.rel (%p240) target = $region48
        $region47: #{tpu_custom_call.1} parent=43 // pred_region
          %243 = dma.done %s236, 256
        $region48: #{tpu_custom_call.1} parent=43 // pred_fallthru
          _
        %s244 = sand.u32 %s31, 1
        %s245 = scalar_lea.sflag [#allocation3], %s244
        %s246 = sand.u32 %s31, 1
        %s247 = smul.addr %s246, 16
        %s248 = scalar_lea.vmem [#allocation2], %s247
        %p249 = pneg %p44
        %p250 = pneg %p41
        %p251 = pneg %p65
        %p252 = pneg %p62
        %p253 = pneg %p86
        %p254 = pneg %p83
        %p255 = pneg %p107
        %p256 = pneg %p104
        %p257 = pneg %p128
        %p258 = pneg %p125
        %p259 = pneg %p149
        %p260 = pneg %p146
        %p261 = pneg %p175
        %p262 = pneg %p172
        %s263 = sand.u32 %s162, 1
        %s264 = scalar_lea.sflag [#allocation4], %s263
        %s265 = sand.u32 %s162, 1
        %s266 = smul.addr %s265, 16
        %s267 = scalar_lea.vmem [#allocation5], %s266
        %v268 = vld [vmem:[%s239] sm:$0xff]
        %v269 = vld [vmem:[%s239 + $0x8] sm:$0xff]
        %v270 = vld [vmem:[%s1] sm:$0xff]
        %273 = vrot.lane.b32.xlu0 %v268, 127
        %v274 = vpop.permute.xlu0 %273
        %275 = vrot.lane.b32.xlu0 %v269, 127
        %v276 = vpop.permute.xlu0 %275
        %vm277 = vcmask 1039360
        %v278 = vsel %vm277, %v274, %v276
        %281 = vrot.lane.b32.xlu0 %v268, 126
        %v282 = vpop.permute.xlu0 %281
        %283 = vrot.lane.b32.xlu0 %v269, 126
        %v284 = vpop.permute.xlu0 %283
        %vm285 = vcmask 1031168
        %v286 = vsel %vm285, %v282, %v284
        %v289 = vld [vmem:[%s2] sm:$0xff]
        %291 = vset.pattern.permute.xlu0 0
        %292 = vperm.xlu0 %291, %v289
        %v293 = vpop.permute.xlu0 %292
        %vm295 = vcmask 195584
        %v297 = vsel %vm295, %v270, 0
        %299 = vmatprep.subr.mxu0 0.0
        %300 = vmatpush1.msra.mxu0 0.0
        %301 = vmatprep.subr.mxu0 0.0
        %302 = vmatpush1.msra.mxu0 0.0
        %303 = vmatprep.subr.mxu0 0.0
        %304 = vmatpush1.msra.mxu0 0.0
        %305 = vmatprep.subr.mxu0 0.0
        %306 = vmatpush1.msra.mxu0 0.0
        %307 = vmatprep.subr.mxu0 0.0
        %308 = vmatpush1.msra.mxu0 0.0
        %309 = vmatprep.subr.mxu0 0.0
        %310 = vmatpush1.msra.mxu0 0.0
        %311 = vmatprep.subr.mxu0 0.0
        %312 = vmatpush1.msra.mxu0 0.0
        %313 = vmatprep.subr.mxu0 0.0
        %314 = vmatpush1.msra.mxu0 0.0
        %315 = vmatprep.subr.mxu0 0.0
        %316 = vmatpush1.msra.mxu0 0.0
        %317 = vmatprep.subr.mxu0 0.0
        %318 = vmatpush1.msra.mxu0 0.0
        %319 = vmatprep.subr.mxu0 0.0
        %320 = vmatpush1.msra.mxu0 0.0
        %321 = vmatprep.subr.mxu0 0.0
        %322 = vmatpush1.msra.mxu0 0.0
        %323 = vmatprep.subr.mxu0 0.0
        %324 = vmatpush1.msra.mxu0 0.0
        %325 = vmatprep.subr.mxu0 %v284
        %326 = vmatpush1.msra.mxu0 %v286
        %327 = vmatprep.subr.mxu0 %v276
        %328 = vmatpush1.msra.mxu0 %v278
        %329 = vmatprep.subr.mxu0 %v269
        %330 = vmatpush1.msra.mxu0 %v268
        %331 = vmatprep.subr.mxu0 0.0
        %332 = vmatpush2.msra.mxu0 0.0
        %333 = vmatprep.subr.mxu0 0.0
        %334 = vmatpush2.msra.mxu0 0.0
        %335 = vmatprep.subr.mxu0 0.0
        %336 = vmatpush2.msra.mxu0 0.0
        %337 = vmatprep.subr.mxu0 0.0
        %338 = vmatpush2.msra.mxu0 0.0
        %339 = vmatprep.subr.mxu0 0.0
        %340 = vmatpush2.msra.mxu0 0.0
        %341 = vmatprep.subr.mxu0 0.0
        %342 = vmatpush2.msra.mxu0 0.0
        %343 = vmatprep.subr.mxu0 0.0
        %344 = vmatpush2.msra.mxu0 0.0
        %345 = vmatprep.subr.mxu0 0.0
        %346 = vmatpush2.msra.mxu0 0.0
        %347 = vmatprep.subr.mxu0 0.0
        %348 = vmatpush2.msra.mxu0 0.0
        %349 = vmatprep.subr.mxu0 0.0
        %350 = vmatpush2.msra.mxu0 0.0
        %351 = vmatprep.subr.mxu0 0.0
        %352 = vmatpush2.msra.mxu0 0.0
        %353 = vmatprep.subr.mxu0 0.0
        %354 = vmatpush2.msra.mxu0 0.0
        %355 = vmatprep.subr.mxu0 0.0
        %356 = vmatpush2.msra.mxu0 0.0
        %357 = vmatprep.subr.mxu0 0.0
        %358 = vmatpush2.msra.mxu0 0.0
        %359 = vmatprep.subr.mxu0 0.0
        %360 = vmatpush2.msra.mxu0 0.0
        %361 = vmatprep.subr.mxu0 0.0
        %362 = vmatpush2.msra.mxu0 0.0
        %363 = vmatprep.mubr.f32.mxu0 0.0
        %364 = vmatmul.mubr.f32.gmra.mxu0 %v297
        %v365 = vpop.f32.mrf.mxu0
        %v366 = vadd.f32 %v293, %v365
        %v367 = vpop.f32.mrf.mxu0
        %v368 = vadd.f32 %v293, %v367
        %369 = vdwg.mxu0
        %v370 = vmax.f32 %v366, 0.0
        %v371 = vmax.f32 %v368, 0.0
        %v372 = vld [vmem:[%s5] sm:$0x3]
        %v374 = vlaneseq
        %v375 = vshrl.u32 %v374, 7
        %v376 = vsub.s32 0, %v375
        %v377 = vrot.slane %v372, %v376
        %v378 = vlaneseq
        %v379 = vshrl.u32 %v378, 7
        %v380 = vsub.s32 1, %v379
        %v381 = vrot.slane %v372, %v380
        %v384 = vmul.f32 %v370, %v377
        %v385 = vmul.f32 %v371, %v381
        %v386 = vld [vmem:[%s3] sm:$0xff]
        %v387 = vld [vmem:[%s3 + $0x8] sm:$0xff]
        %390 = vrot.lane.b32.xlu0 %v384, 127
        %v391 = vpop.permute.xlu0 %390
        %392 = vrot.lane.b32.xlu0 %v385, 127
        %v393 = vpop.permute.xlu0 %392
        %v394 = vsel %vm277, %v391, %v393
        %396 = vrot.lane.b32.xlu0 %v384, 126
        %v397 = vpop.permute.xlu0 %396
        %398 = vrot.lane.b32.xlu0 %v385, 126
        %v399 = vpop.permute.xlu0 %398
        %v400 = vsel %vm285, %v397, %v399
        %v402 = vld [vmem:[%s4] sm:$0xff]
        %v403 = vld [vmem:[%s4 + $0x8] sm:$0xff]
        %405 = vset.pattern.permute.xlu0 0
        %406 = vperm.xlu0 %405, %v402
        %v407 = vpop.permute.xlu0 %406
        %410 = vset.pattern.permute.xlu0 0
        %411 = vperm.xlu0 %410, %v403
        %v412 = vpop.permute.xlu0 %411
        %v415 = vsel %vm295, %v386, 0
        %v418 = vsel %vm295, %v387, 0
        %420 = vmatprep.subr.mxu0 0.0
        %421 = vmatpush1.msra.mxu0 0.0
        %422 = vmatprep.subr.mxu0 0.0
        %423 = vmatpush1.msra.mxu0 0.0
        %424 = vmatprep.subr.mxu0 0.0
        %425 = vmatpush1.msra.mxu0 0.0
        %426 = vmatprep.subr.mxu0 0.0
        %427 = vmatpush1.msra.mxu0 0.0
        %428 = vmatprep.subr.mxu0 0.0
        %429 = vmatpush1.msra.mxu0 0.0
        %430 = vmatprep.subr.mxu0 0.0
        %431 = vmatpush1.msra.mxu0 0.0
        %432 = vmatprep.subr.mxu0 0.0
        %433 = vmatpush1.msra.mxu0 0.0
        %434 = vmatprep.subr.mxu0 0.0
        %435 = vmatpush1.msra.mxu0 0.0
        %436 = vmatprep.subr.mxu0 0.0
        %437 = vmatpush1.msra.mxu0 0.0
        %438 = vmatprep.subr.mxu0 0.0
        %439 = vmatpush1.msra.mxu0 0.0
        %440 = vmatprep.subr.mxu0 0.0
        %441 = vmatpush1.msra.mxu0 0.0
        %442 = vmatprep.subr.mxu0 0.0
        %443 = vmatpush1.msra.mxu0 0.0
        %444 = vmatprep.subr.mxu0 0.0
        %445 = vmatpush1.msra.mxu0 0.0
        %446 = vmatprep.subr.mxu0 0.0
        %447 = vmatpush1.msra.mxu0 %v400
        %448 = vmatprep.subr.mxu0 0.0
        %449 = vmatpush1.msra.mxu0 %v394
        %450 = vmatprep.subr.mxu0 0.0
        %451 = vmatpush1.msra.mxu0 %v384
        %452 = vmatprep.subr.mxu0 0.0
        %453 = vmatpush2.msra.mxu0 0.0
        %454 = vmatprep.subr.mxu0 0.0
        %455 = vmatpush2.msra.mxu0 0.0
        %456 = vmatprep.subr.mxu0 0.0
        %457 = vmatpush2.msra.mxu0 0.0
        %458 = vmatprep.subr.mxu0 0.0
        %459 = vmatpush2.msra.mxu0 0.0
        %460 = vmatprep.subr.mxu0 0.0
        %461 = vmatpush2.msra.mxu0 0.0
        %462 = vmatprep.subr.mxu0 0.0
        %463 = vmatpush2.msra.mxu0 0.0
        %464 = vmatprep.subr.mxu0 0.0
        %465 = vmatpush2.msra.mxu0 0.0
        %466 = vmatprep.subr.mxu0 0.0
        %467 = vmatpush2.msra.mxu0 0.0
        %468 = vmatprep.subr.mxu0 0.0
        %469 = vmatpush2.msra.mxu0 0.0
        %470 = vmatprep.subr.mxu0 0.0
        %471 = vmatpush2.msra.mxu0 0.0
        %472 = vmatprep.subr.mxu0 0.0
        %473 = vmatpush2.msra.mxu0 0.0
        %474 = vmatprep.subr.mxu0 0.0
        %475 = vmatpush2.msra.mxu0 0.0
        %476 = vmatprep.subr.mxu0 0.0
        %477 = vmatpush2.msra.mxu0 0.0
        %478 = vmatprep.subr.mxu0 0.0
        %479 = vmatpush2.msra.mxu0 0.0
        %480 = vmatprep.subr.mxu0 0.0
        %481 = vmatpush2.msra.mxu0 0.0
        %482 = vmatprep.subr.mxu0 0.0
        %483 = vmatpush2.msra.mxu0 0.0
        %484 = vmatprep.mubr.f32.mxu0 0.0
        %485 = vmatmul.mubr.f32.gmra.mxu0 %v415
        %v486 = vpop.f32.mrf.mxu0
        %v487 = vadd.f32 %v407, %v486
        %v488 = vpop.f32.mrf.mxu0
        %489 = vmatprep.mubr.f32.mxu0 0.0
        %490 = vmatmul.mubr.f32.gmra.mxu0 %v418
        %v491 = vpop.f32.mrf.mxu0
        %v492 = vadd.f32 %v412, %v491
        %v493 = vpop.f32.mrf.mxu0
        %494 = vdwg.mxu0
        %v495 = vmax.f32 %v487, 0.0
        %v496 = vmax.f32 %v492, 0.0
        %497 = vst [vmem:[%s267] sm:$0xff] %v495
        %498 = vst [vmem:[%s267 + $0x8] sm:$0xff] %v496
        %s499 = sand.u32 %s162, 1
        %s500 = scalar_lea.sflag [#allocation4], %s499
        %s501 = sand.u32 %s162, 1
        %s502 = smul.addr %s501, 16
        %s503 = scalar_lea.vmem [#allocation5], %s502
        // Predicated region
        $region49: #{tpu_custom_call.1} parent=43 // pred_check
          %p504 = pneg %p172
        $region50: #{tpu_custom_call.1} parent=43 // pred_check_branch
          %506 = sbr.rel (%p504) target = $region52
        $region51: #{tpu_custom_call.1} parent=43 // pred_region
          %s508 = ssub.s32 256, 256
          %509 = vsyncadd %s500, %s508
          %s510 = smul.addr %s23, 2
          %s511 = smul.addr %s510, 128
          %s512 = scalar_lea.hbm %s6, %s511
          %s513 = sshll.u32 %s503, 4
          %s514 = int_to_ptr.vmem [resolvable:$true] %s513
          %519 = dma.vmem_to_hbm [thread:$0]  %s514, 256, %s512, %s500, 128, 128, 8
        $region52: #{tpu_custom_call.1} parent=43 // pred_fallthru
          _
      $region44: #{tpu_custom_call.1} parent=5 // pred_fallthru
        _
      %p520 = scmp.le.s32.totalorder 2, %s18
      // Predicated region
      $region53: #{tpu_custom_call.1} parent=5 // pred_check
        %p521 = pneg %p520
      $region54: #{tpu_custom_call.1} parent=5 // pred_check_branch
        %523 = sbr.rel (%p521) target = $region56
      $region55: #{tpu_custom_call.1} parent=5 // pred_region
        %s524 = ssub.s32 %s18, 2
        // Predicated region
        $region57: #{tpu_custom_call.1} parent=55 // pred_check
          %p525 = pneg %p178
        $region58: #{tpu_custom_call.1} parent=55 // pred_check_branch
          %527 = sbr.rel (%p525) target = $region60
        $region59: #{tpu_custom_call.1} parent=55 // pred_region
          %s528 = sand.u32 %s163, 1
          %s529 = scalar_lea.sflag [#allocation4], %s528
          %s530 = sand.u32 %s163, 1
          %s531 = smul.addr %s530, 16
          %s532 = scalar_lea.vmem [#allocation5], %s531
          %533 = dma.done %s529, 256
        $region60: #{tpu_custom_call.1} parent=55 // pred_fallthru
          _
      $region56: #{tpu_custom_call.1} parent=5 // pred_fallthru
        _
    $region6: #{tpu_custom_call.1} parent=1 // loop_footer
      %s22 = sadd.s32 1, %s18
    $region7: #{tpu_custom_call.1} parent=1 // loop_footer_branch
      %17 = sbr.rel target = $region3
    $region8: #{tpu_custom_call.1} parent=1 // loop_exit
      _
    %534 = vsyncpa [#allocation3], 1
    %s535 = scalar_lea.sflag [#allocation3], 1
    %536 = vsyncpa %s535, 1
    %537 = vsyncpa [#allocation4], 1
    %s538 = scalar_lea.sflag [#allocation4], 1
    %539 = vsyncpa %s538, 1

</llo_original>
